<compile_context>
chip_gen: v6e
topology: v6e:2x2x1
jax: 0.10.0
libtpu: 0.0.40
codegen_flags: <defaults>
</compile_context>

<pallas_src>
import functools

import jax
import jax.numpy as jnp
from jax import lax
from jax.experimental import pallas as pl
from jax.experimental.pallas import tpu as pltpu


def _ada_reg_kernel(x_ref, lab_col_ref, lab_row_ref, out_ref, *, loss_weight,
                    batch_size):
    """Fused weights + Gram-form pairwise-distance reduction (single block)."""
    B = batch_size
    x = x_ref[...]                                   # (B, D) f32
    lab_col = lab_col_ref[...]                       # (B, 1) i32
    lab_row = lab_row_ref[...]                       # (1, B) i32

    # ---- fused cal_weights: w[i] = 1 - count(label_i) / B ------------------
    # count(label_i) == number of batch entries sharing label_i, which equals
    # the per-class count used by the PyTorch reference.
    same = (lab_col == lab_row).astype(jnp.float32)            # (B, B)
    counts = jnp.sum(same, axis=1, keepdims=True)              # (B, 1)
    w = 1.0 - counts * (1.0 / B)                               # (B, 1)

    # ---- pairwise L2 distances via the Gram matrix (MXU) -------------------
    gram = lax.dot_general(
        x, x, (((1,), (1,)), ((), ())),                        # x @ x.T, no transpose op
        preferred_element_type=jnp.float32,
        precision=lax.Precision.HIGHEST)                       # (B, B)
    norms_col = jnp.sum(x * x, axis=-1, keepdims=True)         # (B, 1) lane reduce

    r = lax.broadcasted_iota(jnp.int32, (B, B), 0)
    c = lax.broadcasted_iota(jnp.int32, (B, B), 1)
    # (1, B) row norms off the Gram diagonal (masked sublane reduce, no transpose).
    norms_row = jnp.sum(jnp.where(r == c, gram, 0.0), axis=0, keepdims=True)

    d2 = jnp.maximum(norms_col + norms_row - 2.0 * gram, 0.0)  # clamp cancellation
    dist = jnp.sqrt(d2)                                        # one whole-block sqrt

    # ---- batched epilogue: strict upper triangle (pdist order), weight, sum -
    upper = (c > r).astype(jnp.float32)                        # (B, B)
    total = jnp.sum(dist * upper * w)                          # single weighted reduce

    # NOTE: total == 0 (all rows identical, or B < 2) -> inf, same as PyTorch.
    out_ref[0, 0] = loss_weight / (10.0 * total)


def ada_reg_loss(x, gt_label, *, num_classes=10, loss_weight=1.0):
    """JAX/Pallas equivalent of AdaRegLoss.forward.

    x:        (B, D) float features
    gt_label: (B,)   int class labels
    returns:  scalar float32 loss
    """
    del num_classes  # weights only depend on per-sample label counts in the batch
    x = x.astype(jnp.float32)
    B, _ = x.shape
    lab = gt_label.astype(jnp.int32)
    lab_col = lab.reshape(B, 1)
    lab_row = lab.reshape(1, B)

    out = pl.pallas_call(
        functools.partial(
            _ada_reg_kernel,
            loss_weight=float(loss_weight),
            batch_size=int(B),
        ),
        out_shape=jax.ShapeDtypeStruct((1, 1), jnp.float32),
        in_specs=[
            pl.BlockSpec(memory_space=pltpu.MemorySpace.VMEM),   # x       : (B, D)
            pl.BlockSpec(memory_space=pltpu.MemorySpace.VMEM),   # lab_col : (B, 1)
            pl.BlockSpec(memory_space=pltpu.MemorySpace.VMEM),   # lab_row : (1, B)
        ],
        out_specs=pl.BlockSpec(memory_space=pltpu.MemorySpace.SMEM),  # scalar
    )(x, lab_col, lab_row)
    return out[0, 0]


def _ada_reg_loss_ref(x, gt_label, *, loss_weight=1.0):
    """Pure-JAX reference with identical math, for a sanity check."""
    x = x.astype(jnp.float32)
    B = x.shape[0]
    same = (gt_label[:, None] == gt_label[None, :]).astype(jnp.float32)
    w = 1.0 - jnp.sum(same, axis=1) / B                  # (B,)
    diff = x[:, None, :] - x[None, :, :]
    dist = jnp.sqrt(jnp.maximum(jnp.sum(diff * diff, axis=-1), 0.0))
    row = jnp.arange(B)[:, None]
    col = jnp.arange(B)[None, :]
    mask = (col > row).astype(jnp.float32)
    s = jnp.sum(dist * mask * w[:, None])
    return jnp.float32(loss_weight) / (10.0 * s)


if __name__ == "__main__":
    key = jax.random.PRNGKey(0)
    kx, kl = jax.random.split(key)

    B, D, NUM_CLASSES = 8, 256, 7          # "averaged 256d feature", 7-class labels
    x = jax.random.normal(kx, (B, D), dtype=jnp.float32)
    gt_label = jax.random.randint(kl, (B,), 0, NUM_CLASSES, dtype=jnp.int32)

    loss = ada_reg_loss(x, gt_label, num_classes=NUM_CLASSES, loss_weight=1.0)
    loss = jax.block_until_ready(loss)

    ref = jax.block_until_ready(_ada_reg_loss_ref(x, gt_label, loss_weight=1.0))
    assert jnp.isfinite(loss), "loss is not finite"
    assert jnp.allclose(loss, ref, rtol=1e-4, atol=1e-6), (loss, ref)

    print("KERNEL_OK")
</pallas_src>

<mosaic_0001>
module attributes {stable_mosaic.version = 11 : i64} {
  func.func @_ada_reg_kernel(%arg0: memref<8x256xf32, #tpu.memory_space<vmem>>, %arg1: memref<8x1xi32, #tpu.memory_space<vmem>>, %arg2: memref<1x8xi32, #tpu.memory_space<vmem>>, %arg3: memref<1x1xf32, #tpu.memory_space<smem>>) attributes {dimension_semantics = [], scalar_prefetch = 0 : i64, scratch_operands = 0 : i64, tpu.core_type = #tpu.core_type<tc>} {
    %c0 = arith.constant 0 : index
    %c0_0 = arith.constant 0 : index
    %0 = vector.load %arg0[%c0, %c0_0] : memref<8x256xf32, #tpu.memory_space<vmem>>, vector<8x256xf32>
    %c0_1 = arith.constant 0 : index
    %c0_2 = arith.constant 0 : index
    %1 = vector.load %arg1[%c0_1, %c0_2] : memref<8x1xi32, #tpu.memory_space<vmem>>, vector<8x1xi32>
    %c0_3 = arith.constant 0 : index
    %c0_4 = arith.constant 0 : index
    %2 = vector.load %arg2[%c0_3, %c0_4] : memref<1x8xi32, #tpu.memory_space<vmem>>, vector<1x8xi32>
    %3 = vector.broadcast %1 : vector<8x1xi32> to vector<8x8xi32>
    %4 = vector.broadcast %2 : vector<1x8xi32> to vector<8x8xi32>
    %5 = arith.cmpi eq, %3, %4 : vector<8x8xi32>
    %6 = arith.extui %5 : vector<8x8xi1> to vector<8x8xi32>
    %7 = arith.sitofp %6 : vector<8x8xi32> to vector<8x8xf32>
    %cst = arith.constant dense<0.000000e+00> : vector<8xf32>
    %8 = vector.multi_reduction <add>, %7, %cst [1] : vector<8x8xf32> to vector<8xf32>
    %9 = vector.shape_cast %8 : vector<8xf32> to vector<8x1xf32>
    %cst_5 = arith.constant 1.250000e-01 : f32
    %10 = vector.broadcast %cst_5 : f32 to vector<8x1xf32>
    %11 = arith.mulf %9, %10 : vector<8x1xf32>
    %cst_6 = arith.constant 1.000000e+00 : f32
    %12 = vector.broadcast %cst_6 : f32 to vector<8x1xf32>
    %13 = arith.subf %12, %11 : vector<8x1xf32>
    %cst_7 = arith.constant dense<0.000000e+00> : vector<8x8xf32>
    %14 = tpu.matmul %0, %0, %cst_7 {dimension_numbers = #tpu.dot_dimension_numbers<[1], [1], [0], [0], [0, 0, 1, 0], [], []>, precision = #tpu.contract_precision<fp32>} : vector<8x256xf32>, vector<8x256xf32>, vector<8x8xf32> -> vector<8x8xf32>
    %15 = arith.mulf %0, %0 : vector<8x256xf32>
    %cst_8 = arith.constant dense<0.000000e+00> : vector<8xf32>
    %16 = vector.multi_reduction <add>, %15, %cst_8 [1] : vector<8x256xf32> to vector<8xf32>
    %17 = vector.shape_cast %16 : vector<8xf32> to vector<8x1xf32>
    %18 = tpu.iota {dimensions = array<i32: 0>} : vector<8x8xi32>
    %19 = tpu.iota {dimensions = array<i32: 1>} : vector<8x8xi32>
    %20 = arith.cmpi eq, %18, %19 : vector<8x8xi32>
    %cst_9 = arith.constant 0.000000e+00 : f32
    %21 = vector.broadcast %cst_9 : f32 to vector<8x8xf32>
    %22 = arith.select %20, %14, %21 : vector<8x8xi1>, vector<8x8xf32>
    %cst_10 = arith.constant dense<0.000000e+00> : vector<8xf32>
    %23 = vector.multi_reduction <add>, %22, %cst_10 [0] : vector<8x8xf32> to vector<8xf32>
    %24 = vector.shape_cast %23 : vector<8xf32> to vector<1x8xf32>
    %25 = vector.broadcast %17 : vector<8x1xf32> to vector<8x8xf32>
    %26 = vector.broadcast %24 : vector<1x8xf32> to vector<8x8xf32>
    %27 = arith.addf %25, %26 : vector<8x8xf32>
    %cst_11 = arith.constant 2.000000e+00 : f32
    %28 = vector.broadcast %cst_11 : f32 to vector<8x8xf32>
    %29 = arith.mulf %28, %14 : vector<8x8xf32>
    %30 = arith.subf %27, %29 : vector<8x8xf32>
    %cst_12 = arith.constant 0.000000e+00 : f32
    %31 = vector.broadcast %cst_12 : f32 to vector<8x8xf32>
    %32 = arith.maximumf %30, %31 : vector<8x8xf32>
    %33 = math.sqrt %32 : vector<8x8xf32>
    %34 = arith.cmpi sgt, %19, %18 : vector<8x8xi32>
    %35 = arith.extui %34 : vector<8x8xi1> to vector<8x8xi32>
    %36 = arith.sitofp %35 : vector<8x8xi32> to vector<8x8xf32>
    %37 = arith.mulf %33, %36 : vector<8x8xf32>
    %38 = vector.broadcast %13 : vector<8x1xf32> to vector<8x8xf32>
    %39 = arith.mulf %37, %38 : vector<8x8xf32>
    %40 = vector.shape_cast %39 : vector<8x8xf32> to vector<1x8x8xf32>
    %cst_13 = arith.constant dense<0.000000e+00> : vector<1xf32>
    %41 = vector.multi_reduction <add>, %40, %cst_13 [1, 2] : vector<1x8x8xf32> to vector<1xf32>
    %42 = vector.shape_cast %41 : vector<1xf32> to vector<1x1x1xf32>
    %43 = vector.extract %42[0, 0, 0] : f32 from vector<1x1x1xf32>
    %cst_14 = arith.constant 1.000000e+01 : f32
    %44 = arith.mulf %cst_14, %43 : f32
    %cst_15 = arith.constant 1.000000e+00 : f32
    %45 = arith.divf %cst_15, %44 : f32
    %c0_16 = arith.constant 0 : index
    %c0_17 = arith.constant 0 : index
    %46 = memref.load %arg3[%c0_16, %c0_17] : memref<1x1xf32, #tpu.memory_space<smem>>
    memref.store %45, %arg3[%c0_16, %c0_17] : memref<1x1xf32, #tpu.memory_space<smem>>
    return
  }
}

</mosaic_0001>

<llo_original>
// kernel: tpu_custom_call.1
$region0: #{tpu_custom_call.1}
  #allocation0 [shape = 'u32[]', space=smem, size = 0x4, offset = 0x4, fixed_abs, tag = 'smem constant byte address 0x4 - core index']
  #allocation1 [shape = 'u32[144,128]{1,0:T(1,128)}', space=vmem, size = 0x12000, scoped, tag = 'internal scratch']
  %s0 = inlined_call_operand.hbm [shape: f32[8,256], index: 0, kind: input, shape index: {}]
  %s1 = inlined_call_operand.vmem [shape: s32[8,1], index: 1, kind: input, shape index: {}]
  %s2 = inlined_call_operand.vmem [shape: s32[1,8], index: 2, kind: input, shape index: {}]
  %s3 = inlined_call_operand.hbm [shape: f32[1,1], index: 3, kind: output, shape index: {}]
  %s4 = sld [smem:[#allocation0]]
  $region26: #{tpu_custom_call.1} parent=0
    _
  %s6 = ssub.s32 1, %s4
  %s7 = scalar_select 0, %s6, %s4
  $region1: #{tpu_custom_call.1} parent=0
    #allocation2 [shape = 'u8[8192]{0}', space=vmem, size = 0x2000, scoped, tag = 'input window, operand 0, single buffered']
    #allocation3 [shape = 's32[1]{0}', space=sflag, size = 0x4, scoped, tag = 'scoped memory for tpu_custom_call.1']
    #allocation4 [shape = 's32[1]{0}', space=sflag, size = 0x4, scoped, tag = 'scoped memory for tpu_custom_call.1']
    #allocation5 [shape = 'u8[512]{0}', space=smem, size = 0x200, scoped, tag = 'output window, operand 0, single buffered']
    %8 = vsyncpa [#allocation3], 0
    %9 = vsyncpa [#allocation4], 0
    // Predicated region
    $region2: #{tpu_custom_call.1} parent=1 // pred_check
      _
    $region3: #{tpu_custom_call.1} parent=1 // pred_check_branch
      %11 = sbr.rel (0) target = $region5
    $region4: #{tpu_custom_call.1} parent=1 // pred_region
      %s13 = ssub.s32 256, 256
      %14 = vsyncadd [#allocation3], %s13
      %s16 = sshll.u32 [#allocation2], 4
      %s17 = int_to_ptr.vmem [resolvable:$true] %s16
      %19 = dma.hbm_to_vmem [thread:$0]  %s0, 256, %s17, [#allocation3]
    $region5: #{tpu_custom_call.1} parent=1 // pred_fallthru
      _
    // Predicated region
    $region6: #{tpu_custom_call.1} parent=1 // pred_check
      _
    $region7: #{tpu_custom_call.1} parent=1 // pred_check_branch
      %21 = sbr.rel (0) target = $region9
    $region8: #{tpu_custom_call.1} parent=1 // pred_region
      _
    $region9: #{tpu_custom_call.1} parent=1 // pred_fallthru
      _
    // Predicated region
    $region10: #{tpu_custom_call.1} parent=1 // pred_check
      _
    $region11: #{tpu_custom_call.1} parent=1 // pred_check_branch
      %23 = sbr.rel (0) target = $region13
    $region12: #{tpu_custom_call.1} parent=1 // pred_region
      _
    $region13: #{tpu_custom_call.1} parent=1 // pred_fallthru
      _
    // Predicated region
    $region14: #{tpu_custom_call.1} parent=1 // pred_check
      _
    $region15: #{tpu_custom_call.1} parent=1 // pred_check_branch
      %25 = sbr.rel (0) target = $region17
    $region16: #{tpu_custom_call.1} parent=1 // pred_region
      %26 = dma.done [#allocation3], 256
    $region17: #{tpu_custom_call.1} parent=1 // pred_fallthru
      _
    %v27 = vld [vmem:[#allocation2] sm:$0xff]
    %v28 = vld [vmem:[#allocation2 + $0x8] sm:$0xff]
    %v29 = vld [vmem:[%s1] sm:$0xff]
    %v30 = vld [vmem:[%s2] sm:$0x1]
    %31 = vset.pattern.permute.xlu0 0
    %32 = vperm.xlu0 %31, %v29
    %v33 = vpop.permute.xlu0 %32
    %v34 = vlaneseq
    %v35 = vshrl.u32 %v34, 7
    %v36 = vsub.s32 0, %v35
    %v37 = vrot.slane %v30, %v36
    %vm38 = vcmp.eq.s32.totalorder %v33, %v37
    %v39 = vsel %vm38, 1, 0
    %v40 = vcvt.s32.f32 %v39
    %vm41 = vcmask 64512
    %v42 = vsel %vm41, %v40, 0.0
    %43 = vadd.xlane.f32.xlu0 %v42
    %v44 = vpop.xlane.xlu0 %43
    %v45 = vmul.f32 %v44, 0.125
    %v46 = vsub.f32 1.0, %v45
    %47 = vmatprep.subr.mxu0 0.0
    %48 = vmatpush1.xpose.msra.mxu0 0.0
    %49 = vmatprep.subr.mxu0 0.0
    %50 = vmatpush1.xpose.msra.mxu0 0.0
    %51 = vmatprep.subr.mxu0 0.0
    %52 = vmatpush1.xpose.msra.mxu0 0.0
    %53 = vmatprep.subr.mxu0 0.0
    %54 = vmatpush1.xpose.msra.mxu0 0.0
    %55 = vmatprep.subr.mxu0 0.0
    %56 = vmatpush1.xpose.msra.mxu0 0.0
    %57 = vmatprep.subr.mxu0 0.0
    %58 = vmatpush1.xpose.msra.mxu0 0.0
    %59 = vmatprep.subr.mxu0 0.0
    %60 = vmatpush1.xpose.msra.mxu0 0.0
    %61 = vmatprep.subr.mxu0 0.0
    %62 = vmatpush1.xpose.msra.mxu0 0.0
    %63 = vmatprep.subr.mxu0 0.0
    %64 = vmatpush1.xpose.msra.mxu0 0.0
    %65 = vmatprep.subr.mxu0 0.0
    %66 = vmatpush1.xpose.msra.mxu0 0.0
    %67 = vmatprep.subr.mxu0 0.0
    %68 = vmatpush1.xpose.msra.mxu0 0.0
    %69 = vmatprep.subr.mxu0 0.0
    %70 = vmatpush1.xpose.msra.mxu0 0.0
    %71 = vmatprep.subr.mxu0 0.0
    %72 = vmatpush1.xpose.msra.mxu0 0.0
    %73 = vmatprep.subr.mxu0 0.0
    %74 = vmatpush1.xpose.msra.mxu0 0.0
    %75 = vmatprep.subr.mxu0 0.0
    %76 = vmatpush1.xpose.msra.mxu0 0.0
    %v77 = vand.u32 %v28, 4294901760
    %78 = vmatprep.subr.mxu0 %v77
    %v79 = vand.u32 %v27, 4294901760
    %80 = vmatpush1.xpose.msra.mxu0 %v79
    %81 = vmatprep.subr.mxu0 0.0
    %82 = vmatpush2.xpose.msra.mxu0 0.0
    %83 = vmatprep.subr.mxu0 0.0
    %84 = vmatpush2.xpose.msra.mxu0 0.0
    %85 = vmatprep.subr.mxu0 0.0
    %86 = vmatpush2.xpose.msra.mxu0 0.0
    %87 = vmatprep.subr.mxu0 0.0
    %88 = vmatpush2.xpose.msra.mxu0 0.0
    %89 = vmatprep.subr.mxu0 0.0
    %90 = vmatpush2.xpose.msra.mxu0 0.0
    %91 = vmatprep.subr.mxu0 0.0
    %92 = vmatpush2.xpose.msra.mxu0 0.0
    %93 = vmatprep.subr.mxu0 0.0
    %94 = vmatpush2.xpose.msra.mxu0 0.0
    %95 = vmatprep.subr.mxu0 0.0
    %96 = vmatpush2.xpose.msra.mxu0 0.0
    %97 = vmatprep.subr.mxu0 0.0
    %98 = vmatpush2.xpose.msra.mxu0 0.0
    %99 = vmatprep.subr.mxu0 0.0
    %100 = vmatpush2.xpose.msra.mxu0 0.0
    %101 = vmatprep.subr.mxu0 0.0
    %102 = vmatpush2.xpose.msra.mxu0 0.0
    %103 = vmatprep.subr.mxu0 0.0
    %104 = vmatpush2.xpose.msra.mxu0 0.0
    %105 = vmatprep.subr.mxu0 0.0
    %106 = vmatpush2.xpose.msra.mxu0 0.0
    %107 = vmatprep.subr.mxu0 0.0
    %108 = vmatpush2.xpose.msra.mxu0 0.0
    %109 = vmatprep.subr.mxu0 0.0
    %110 = vmatpush2.xpose.msra.mxu0 0.0
    %111 = vmatprep.subr.mxu0 0.0
    %112 = vmatpush2.xpose.msra.mxu0 0.0
    %v113 = vand.u32 %v28, 4294901760
    %v114 = vsub.f32 %v28, %v113
    %v115 = vand.u32 %v114, 4294901760
    %v116 = vsub.f32 %v114, %v115
    %v117 = vand.u32 %v116, 4294901760
    %118 = vmatprep.mubr.f32.mxu0 %v117
    %v119 = vand.u32 %v27, 4294901760
    %v120 = vsub.f32 %v27, %v119
    %v121 = vand.u32 %v120, 4294901760
    %v122 = vsub.f32 %v120, %v121
    %v123 = vand.u32 %v122, 4294901760
    %124 = vmatmul.mubr.f32.gmra.mxu0 %v123
    %v125 = vpop.f32.mrf.mxu0
    %v126 = vadd.f32 0.0, %v125
    %v127 = vpop.f32.mrf.mxu0
    %128 = vdwg.mxu0
    %129 = vmatprep.subr.mxu0 0.0
    %130 = vmatpush1.xpose.msra.mxu0 0.0
    %131 = vmatprep.subr.mxu0 0.0
    %132 = vmatpush1.xpose.msra.mxu0 0.0
    %133 = vmatprep.subr.mxu0 0.0
    %134 = vmatpush1.xpose.msra.mxu0 0.0
    %135 = vmatprep.subr.mxu0 0.0
    %136 = vmatpush1.xpose.msra.mxu0 0.0
    %137 = vmatprep.subr.mxu0 0.0
    %138 = vmatpush1.xpose.msra.mxu0 0.0
    %139 = vmatprep.subr.mxu0 0.0
    %140 = vmatpush1.xpose.msra.mxu0 0.0
    %141 = vmatprep.subr.mxu0 0.0
    %142 = vmatpush1.xpose.msra.mxu0 0.0
    %143 = vmatprep.subr.mxu0 0.0
    %144 = vmatpush1.xpose.msra.mxu0 0.0
    %145 = vmatprep.subr.mxu0 0.0
    %146 = vmatpush1.xpose.msra.mxu0 0.0
    %147 = vmatprep.subr.mxu0 0.0
    %148 = vmatpush1.xpose.msra.mxu0 0.0
    %149 = vmatprep.subr.mxu0 0.0
    %150 = vmatpush1.xpose.msra.mxu0 0.0
    %151 = vmatprep.subr.mxu0 0.0
    %152 = vmatpush1.xpose.msra.mxu0 0.0
    %153 = vmatprep.subr.mxu0 0.0
    %154 = vmatpush1.xpose.msra.mxu0 0.0
    %155 = vmatprep.subr.mxu0 0.0
    %156 = vmatpush1.xpose.msra.mxu0 0.0
    %157 = vmatprep.subr.mxu0 0.0
    %158 = vmatpush1.xpose.msra.mxu0 0.0
    %v159 = vand.u32 %v28, 4294901760
    %v160 = vsub.f32 %v28, %v159
    %v161 = vand.u32 %v160, 4294901760
    %v162 = vsub.f32 %v160, %v161
    %v163 = vand.u32 %v162, 4294901760
    %164 = vmatprep.subr.mxu0 %v163
    %v165 = vand.u32 %v27, 4294901760
    %v166 = vsub.f32 %v27, %v165
    %v167 = vand.u32 %v166, 4294901760
    %v168 = vsub.f32 %v166, %v167
    %v169 = vand.u32 %v168, 4294901760
    %170 = vmatpush1.xpose.msra.mxu0 %v169
    %171 = vmatprep.subr.mxu0 0.0
    %172 = vmatpush2.xpose.msra.mxu0 0.0
    %173 = vmatprep.subr.mxu0 0.0
    %174 = vmatpush2.xpose.msra.mxu0 0.0
    %175 = vmatprep.subr.mxu0 0.0
    %176 = vmatpush2.xpose.msra.mxu0 0.0
    %177 = vmatprep.subr.mxu0 0.0
    %178 = vmatpush2.xpose.msra.mxu0 0.0
    %179 = vmatprep.subr.mxu0 0.0
    %180 = vmatpush2.xpose.msra.mxu0 0.0
    %181 = vmatprep.subr.mxu0 0.0
    %182 = vmatpush2.xpose.msra.mxu0 0.0
    %183 = vmatprep.subr.mxu0 0.0
    %184 = vmatpush2.xpose.msra.mxu0 0.0
    %185 = vmatprep.subr.mxu0 0.0
    %186 = vmatpush2.xpose.msra.mxu0 0.0
    %187 = vmatprep.subr.mxu0 0.0
    %188 = vmatpush2.xpose.msra.mxu0 0.0
    %189 = vmatprep.subr.mxu0 0.0
    %190 = vmatpush2.xpose.msra.mxu0 0.0
    %191 = vmatprep.subr.mxu0 0.0
    %192 = vmatpush2.xpose.msra.mxu0 0.0
    %193 = vmatprep.subr.mxu0 0.0
    %194 = vmatpush2.xpose.msra.mxu0 0.0
    %195 = vmatprep.subr.mxu0 0.0
    %196 = vmatpush2.xpose.msra.mxu0 0.0
    %197 = vmatprep.subr.mxu0 0.0
    %198 = vmatpush2.xpose.msra.mxu0 0.0
    %199 = vmatprep.subr.mxu0 0.0
    %200 = vmatpush2.xpose.msra.mxu0 0.0
    %201 = vmatprep.subr.mxu0 0.0
    %202 = vmatpush2.xpose.msra.mxu0 0.0
    %v203 = vand.u32 %v28, 4294901760
    %204 = vmatprep.mubr.f32.mxu0 %v203
    %v205 = vand.u32 %v27, 4294901760
    %206 = vmatmul.mubr.f32.gmra.mxu0 %v205
    %v207 = vpop.f32.mrf.mxu0
    %v208 = vadd.f32 %v126, %v207
    %v209 = vpop.f32.mrf.mxu0
    %210 = vdwg.mxu0
    %211 = vmatprep.subr.mxu0 0.0
    %212 = vmatpush1.xpose.msra.mxu0 0.0
    %213 = vmatprep.subr.mxu0 0.0
    %214 = vmatpush1.xpose.msra.mxu0 0.0
    %215 = vmatprep.subr.mxu0 0.0
    %216 = vmatpush1.xpose.msra.mxu0 0.0
    %217 = vmatprep.subr.mxu0 0.0
    %218 = vmatpush1.xpose.msra.mxu0 0.0
    %219 = vmatprep.subr.mxu0 0.0
    %220 = vmatpush1.xpose.msra.mxu0 0.0
    %221 = vmatprep.subr.mxu0 0.0
    %222 = vmatpush1.xpose.msra.mxu0 0.0
    %223 = vmatprep.subr.mxu0 0.0
    %224 = vmatpush1.xpose.msra.mxu0 0.0
    %225 = vmatprep.subr.mxu0 0.0
    %226 = vmatpush1.xpose.msra.mxu0 0.0
    %227 = vmatprep.subr.mxu0 0.0
    %228 = vmatpush1.xpose.msra.mxu0 0.0
    %229 = vmatprep.subr.mxu0 0.0
    %230 = vmatpush1.xpose.msra.mxu0 0.0
    %231 = vmatprep.subr.mxu0 0.0
    %232 = vmatpush1.xpose.msra.mxu0 0.0
    %233 = vmatprep.subr.mxu0 0.0
    %234 = vmatpush1.xpose.msra.mxu0 0.0
    %235 = vmatprep.subr.mxu0 0.0
    %236 = vmatpush1.xpose.msra.mxu0 0.0
    %237 = vmatprep.subr.mxu0 0.0
    %238 = vmatpush1.xpose.msra.mxu0 0.0
    %239 = vmatprep.subr.mxu0 0.0
    %240 = vmatpush1.xpose.msra.mxu0 0.0
    %v241 = vand.u32 %v28, 4294901760
    %v242 = vsub.f32 %v28, %v241
    %243 = vmatprep.subr.mxu0 %v242
    %v244 = vand.u32 %v27, 4294901760
    %v245 = vsub.f32 %v27, %v244
    %246 = vmatpush1.xpose.msra.mxu0 %v245
    %247 = vmatprep.subr.mxu0 0.0
    %248 = vmatpush2.xpose.msra.mxu0 0.0
    %249 = vmatprep.subr.mxu0 0.0
    %250 = vmatpush2.xpose.msra.mxu0 0.0
    %251 = vmatprep.subr.mxu0 0.0
    %252 = vmatpush2.xpose.msra.mxu0 0.0
    %253 = vmatprep.subr.mxu0 0.0
    %254 = vmatpush2.xpose.msra.mxu0 0.0
    %255 = vmatprep.subr.mxu0 0.0
    %256 = vmatpush2.xpose.msra.mxu0 0.0
    %257 = vmatprep.subr.mxu0 0.0
    %258 = vmatpush2.xpose.msra.mxu0 0.0
    %259 = vmatprep.subr.mxu0 0.0
    %260 = vmatpush2.xpose.msra.mxu0 0.0
    %261 = vmatprep.subr.mxu0 0.0
    %262 = vmatpush2.xpose.msra.mxu0 0.0
    %263 = vmatprep.subr.mxu0 0.0
    %264 = vmatpush2.xpose.msra.mxu0 0.0
    %265 = vmatprep.subr.mxu0 0.0
    %266 = vmatpush2.xpose.msra.mxu0 0.0
    %267 = vmatprep.subr.mxu0 0.0
    %268 = vmatpush2.xpose.msra.mxu0 0.0
    %269 = vmatprep.subr.mxu0 0.0
    %270 = vmatpush2.xpose.msra.mxu0 0.0
    %271 = vmatprep.subr.mxu0 0.0
    %272 = vmatpush2.xpose.msra.mxu0 0.0
    %273 = vmatprep.subr.mxu0 0.0
    %274 = vmatpush2.xpose.msra.mxu0 0.0
    %275 = vmatprep.subr.mxu0 0.0
    %276 = vmatpush2.xpose.msra.mxu0 0.0
    %277 = vmatprep.subr.mxu0 0.0
    %278 = vmatpush2.xpose.msra.mxu0 0.0
    %v279 = vand.u32 %v28, 4294901760
    %v280 = vsub.f32 %v28, %v279
    %281 = vmatprep.mubr.f32.mxu0 %v280
    %v282 = vand.u32 %v27, 4294901760
    %v283 = vsub.f32 %v27, %v282
    %284 = vmatmul.mubr.f32.gmra.mxu0 %v283
    %v285 = vpop.f32.mrf.mxu0
    %v286 = vadd.f32 %v208, %v285
    %v287 = vpop.f32.mrf.mxu0
    %288 = vdwg.mxu0
    %289 = vmatprep.subr.mxu0 0.0
    %290 = vmatpush1.xpose.msra.mxu0 0.0
    %291 = vmatprep.subr.mxu0 0.0
    %292 = vmatpush1.xpose.msra.mxu0 0.0
    %293 = vmatprep.subr.mxu0 0.0
    %294 = vmatpush1.xpose.msra.mxu0 0.0
    %295 = vmatprep.subr.mxu0 0.0
    %296 = vmatpush1.xpose.msra.mxu0 0.0
    %297 = vmatprep.subr.mxu0 0.0
    %298 = vmatpush1.xpose.msra.mxu0 0.0
    %299 = vmatprep.subr.mxu0 0.0
    %300 = vmatpush1.xpose.msra.mxu0 0.0
    %301 = vmatprep.subr.mxu0 0.0
    %302 = vmatpush1.xpose.msra.mxu0 0.0
    %303 = vmatprep.subr.mxu0 0.0
    %304 = vmatpush1.xpose.msra.mxu0 0.0
    %305 = vmatprep.subr.mxu0 0.0
    %306 = vmatpush1.xpose.msra.mxu0 0.0
    %307 = vmatprep.subr.mxu0 0.0
    %308 = vmatpush1.xpose.msra.mxu0 0.0
    %309 = vmatprep.subr.mxu0 0.0
    %310 = vmatpush1.xpose.msra.mxu0 0.0
    %311 = vmatprep.subr.mxu0 0.0
    %312 = vmatpush1.xpose.msra.mxu0 0.0
    %313 = vmatprep.subr.mxu0 0.0
    %314 = vmatpush1.xpose.msra.mxu0 0.0
    %315 = vmatprep.subr.mxu0 0.0
    %316 = vmatpush1.xpose.msra.mxu0 0.0
    %317 = vmatprep.subr.mxu0 0.0
    %318 = vmatpush1.xpose.msra.mxu0 0.0
    %v319 = vand.u32 %v28, 4294901760
    %320 = vmatprep.subr.mxu0 %v319
    %v321 = vand.u32 %v27, 4294901760
    %322 = vmatpush1.xpose.msra.mxu0 %v321
    %323 = vmatprep.subr.mxu0 0.0
    %324 = vmatpush2.xpose.msra.mxu0 0.0
    %325 = vmatprep.subr.mxu0 0.0
    %326 = vmatpush2.xpose.msra.mxu0 0.0
    %327 = vmatprep.subr.mxu0 0.0
    %328 = vmatpush2.xpose.msra.mxu0 0.0
    %329 = vmatprep.subr.mxu0 0.0
    %330 = vmatpush2.xpose.msra.mxu0 0.0
    %331 = vmatprep.subr.mxu0 0.0
    %332 = vmatpush2.xpose.msra.mxu0 0.0
    %333 = vmatprep.subr.mxu0 0.0
    %334 = vmatpush2.xpose.msra.mxu0 0.0
    %335 = vmatprep.subr.mxu0 0.0
    %336 = vmatpush2.xpose.msra.mxu0 0.0
    %337 = vmatprep.subr.mxu0 0.0
    %338 = vmatpush2.xpose.msra.mxu0 0.0
    %339 = vmatprep.subr.mxu0 0.0
    %340 = vmatpush2.xpose.msra.mxu0 0.0
    %341 = vmatprep.subr.mxu0 0.0
    %342 = vmatpush2.xpose.msra.mxu0 0.0
    %343 = vmatprep.subr.mxu0 0.0
    %344 = vmatpush2.xpose.msra.mxu0 0.0
    %345 = vmatprep.subr.mxu0 0.0
    %346 = vmatpush2.xpose.msra.mxu0 0.0
    %347 = vmatprep.subr.mxu0 0.0
    %348 = vmatpush2.xpose.msra.mxu0 0.0
    %349 = vmatprep.subr.mxu0 0.0
    %350 = vmatpush2.xpose.msra.mxu0 0.0
    %351 = vmatprep.subr.mxu0 0.0
    %352 = vmatpush2.xpose.msra.mxu0 0.0
    %353 = vmatprep.subr.mxu0 0.0
    %354 = vmatpush2.xpose.msra.mxu0 0.0
    %v355 = vand.u32 %v28, 4294901760
    %v356 = vsub.f32 %v28, %v355
    %v357 = vand.u32 %v356, 4294901760
    %358 = vmatprep.mubr.f32.mxu0 %v357
    %v359 = vand.u32 %v27, 4294901760
    %v360 = vsub.f32 %v27, %v359
    %v361 = vand.u32 %v360, 4294901760
    %362 = vmatmul.mubr.f32.gmra.mxu0 %v361
    %v363 = vpop.f32.mrf.mxu0
    %v364 = vadd.f32 %v286, %v363
    %v365 = vpop.f32.mrf.mxu0
    %366 = vdwg.mxu0
    %367 = vmatprep.subr.mxu0 0.0
    %368 = vmatpush1.xpose.msra.mxu0 0.0
    %369 = vmatprep.subr.mxu0 0.0
    %370 = vmatpush1.xpose.msra.mxu0 0.0
    %371 = vmatprep.subr.mxu0 0.0
    %372 = vmatpush1.xpose.msra.mxu0 0.0
    %373 = vmatprep.subr.mxu0 0.0
    %374 = vmatpush1.xpose.msra.mxu0 0.0
    %375 = vmatprep.subr.mxu0 0.0
    %376 = vmatpush1.xpose.msra.mxu0 0.0
    %377 = vmatprep.subr.mxu0 0.0
    %378 = vmatpush1.xpose.msra.mxu0 0.0
    %379 = vmatprep.subr.mxu0 0.0
    %380 = vmatpush1.xpose.msra.mxu0 0.0
    %381 = vmatprep.subr.mxu0 0.0
    %382 = vmatpush1.xpose.msra.mxu0 0.0
    %383 = vmatprep.subr.mxu0 0.0
    %384 = vmatpush1.xpose.msra.mxu0 0.0
    %385 = vmatprep.subr.mxu0 0.0
    %386 = vmatpush1.xpose.msra.mxu0 0.0
    %387 = vmatprep.subr.mxu0 0.0
    %388 = vmatpush1.xpose.msra.mxu0 0.0
    %389 = vmatprep.subr.mxu0 0.0
    %390 = vmatpush1.xpose.msra.mxu0 0.0
    %391 = vmatprep.subr.mxu0 0.0
    %392 = vmatpush1.xpose.msra.mxu0 0.0
    %393 = vmatprep.subr.mxu0 0.0
    %394 = vmatpush1.xpose.msra.mxu0 0.0
    %395 = vmatprep.subr.mxu0 0.0
    %396 = vmatpush1.xpose.msra.mxu0 0.0
    %v397 = vand.u32 %v28, 4294901760
    %v398 = vsub.f32 %v28, %v397
    %v399 = vand.u32 %v398, 4294901760
    %400 = vmatprep.subr.mxu0 %v399
    %v401 = vand.u32 %v27, 4294901760
    %v402 = vsub.f32 %v27, %v401
    %v403 = vand.u32 %v402, 4294901760
    %404 = vmatpush1.xpose.msra.mxu0 %v403
    %405 = vmatprep.subr.mxu0 0.0
    %406 = vmatpush2.xpose.msra.mxu0 0.0
    %407 = vmatprep.subr.mxu0 0.0
    %408 = vmatpush2.xpose.msra.mxu0 0.0
    %409 = vmatprep.subr.mxu0 0.0
    %410 = vmatpush2.xpose.msra.mxu0 0.0
    %411 = vmatprep.subr.mxu0 0.0
    %412 = vmatpush2.xpose.msra.mxu0 0.0
    %413 = vmatprep.subr.mxu0 0.0
    %414 = vmatpush2.xpose.msra.mxu0 0.0
    %415 = vmatprep.subr.mxu0 0.0
    %416 = vmatpush2.xpose.msra.mxu0 0.0
    %417 = vmatprep.subr.mxu0 0.0
    %418 = vmatpush2.xpose.msra.mxu0 0.0
    %419 = vmatprep.subr.mxu0 0.0
    %420 = vmatpush2.xpose.msra.mxu0 0.0
    %421 = vmatprep.subr.mxu0 0.0
    %422 = vmatpush2.xpose.msra.mxu0 0.0
    %423 = vmatprep.subr.mxu0 0.0
    %424 = vmatpush2.xpose.msra.mxu0 0.0
    %425 = vmatprep.subr.mxu0 0.0
    %426 = vmatpush2.xpose.msra.mxu0 0.0
    %427 = vmatprep.subr.mxu0 0.0
    %428 = vmatpush2.xpose.msra.mxu0 0.0
    %429 = vmatprep.subr.mxu0 0.0
    %430 = vmatpush2.xpose.msra.mxu0 0.0
    %431 = vmatprep.subr.mxu0 0.0
    %432 = vmatpush2.xpose.msra.mxu0 0.0
    %433 = vmatprep.subr.mxu0 0.0
    %434 = vmatpush2.xpose.msra.mxu0 0.0
    %435 = vmatprep.subr.mxu0 0.0
    %436 = vmatpush2.xpose.msra.mxu0 0.0
    %v437 = vand.u32 %v28, 4294901760
    %438 = vmatprep.mubr.f32.mxu0 %v437
    %v439 = vand.u32 %v27, 4294901760
    %440 = vmatmul.mubr.f32.gmra.mxu0 %v439
    %v441 = vpop.f32.mrf.mxu0
    %v442 = vadd.f32 %v364, %v441
    %v443 = vpop.f32.mrf.mxu0
    %444 = vdwg.mxu0
    %445 = vmatprep.subr.mxu0 0.0
    %446 = vmatpush1.xpose.msra.mxu0 0.0
    %447 = vmatprep.subr.mxu0 0.0
    %448 = vmatpush1.xpose.msra.mxu0 0.0
    %449 = vmatprep.subr.mxu0 0.0
    %450 = vmatpush1.xpose.msra.mxu0 0.0
    %451 = vmatprep.subr.mxu0 0.0
    %452 = vmatpush1.xpose.msra.mxu0 0.0
    %453 = vmatprep.subr.mxu0 0.0
    %454 = vmatpush1.xpose.msra.mxu0 0.0
    %455 = vmatprep.subr.mxu0 0.0
    %456 = vmatpush1.xpose.msra.mxu0 0.0
    %457 = vmatprep.subr.mxu0 0.0
    %458 = vmatpush1.xpose.msra.mxu0 0.0
    %459 = vmatprep.subr.mxu0 0.0
    %460 = vmatpush1.xpose.msra.mxu0 0.0
    %461 = vmatprep.subr.mxu0 0.0
    %462 = vmatpush1.xpose.msra.mxu0 0.0
    %463 = vmatprep.subr.mxu0 0.0
    %464 = vmatpush1.xpose.msra.mxu0 0.0
    %465 = vmatprep.subr.mxu0 0.0
    %466 = vmatpush1.xpose.msra.mxu0 0.0
    %467 = vmatprep.subr.mxu0 0.0
    %468 = vmatpush1.xpose.msra.mxu0 0.0
    %469 = vmatprep.subr.mxu0 0.0
    %470 = vmatpush1.xpose.msra.mxu0 0.0
    %471 = vmatprep.subr.mxu0 0.0
    %472 = vmatpush1.xpose.msra.mxu0 0.0
    %473 = vmatprep.subr.mxu0 0.0
    %474 = vmatpush1.xpose.msra.mxu0 0.0
    %v475 = vand.u32 %v28, 4294901760
    %476 = vmatprep.subr.mxu0 %v475
    %v477 = vand.u32 %v27, 4294901760
    %478 = vmatpush1.xpose.msra.mxu0 %v477
    %479 = vmatprep.subr.mxu0 0.0
    %480 = vmatpush2.xpose.msra.mxu0 0.0
    %481 = vmatprep.subr.mxu0 0.0
    %482 = vmatpush2.xpose.msra.mxu0 0.0
    %483 = vmatprep.subr.mxu0 0.0
    %484 = vmatpush2.xpose.msra.mxu0 0.0
    %485 = vmatprep.subr.mxu0 0.0
    %486 = vmatpush2.xpose.msra.mxu0 0.0
    %487 = vmatprep.subr.mxu0 0.0
    %488 = vmatpush2.xpose.msra.mxu0 0.0
    %489 = vmatprep.subr.mxu0 0.0
    %490 = vmatpush2.xpose.msra.mxu0 0.0
    %491 = vmatprep.subr.mxu0 0.0
    %492 = vmatpush2.xpose.msra.mxu0 0.0
    %493 = vmatprep.subr.mxu0 0.0
    %494 = vmatpush2.xpose.msra.mxu0 0.0
    %495 = vmatprep.subr.mxu0 0.0
    %496 = vmatpush2.xpose.msra.mxu0 0.0
    %497 = vmatprep.subr.mxu0 0.0
    %498 = vmatpush2.xpose.msra.mxu0 0.0
    %499 = vmatprep.subr.mxu0 0.0
    %500 = vmatpush2.xpose.msra.mxu0 0.0
    %501 = vmatprep.subr.mxu0 0.0
    %502 = vmatpush2.xpose.msra.mxu0 0.0
    %503 = vmatprep.subr.mxu0 0.0
    %504 = vmatpush2.xpose.msra.mxu0 0.0
    %505 = vmatprep.subr.mxu0 0.0
    %506 = vmatpush2.xpose.msra.mxu0 0.0
    %507 = vmatprep.subr.mxu0 0.0
    %508 = vmatpush2.xpose.msra.mxu0 0.0
    %509 = vmatprep.subr.mxu0 0.0
    %510 = vmatpush2.xpose.msra.mxu0 0.0
    %v511 = vand.u32 %v28, 4294901760
    %512 = vmatprep.mubr.f32.mxu0 %v511
    %v513 = vand.u32 %v27, 4294901760
    %514 = vmatmul.mubr.f32.gmra.mxu0 %v513
    %v515 = vpop.f32.mrf.mxu0
    %v516 = vadd.f32 %v442, %v515
    %v517 = vpop.f32.mrf.mxu0
    %518 = vdwg.mxu0
    %v519 = vmul.f32 %v27, %v27
    %v520 = vmul.f32 %v28, %v28
    %v521 = vadd.f32 %v519, %v520
    %522 = vadd.xlane.f32.xlu0 %v521
    %v523 = vpop.xlane.xlu0 %522
    %v524 = vlaneseq
    %v525 = vshrl.u32 %v524, 7
    %v526 = vlaneseq
    %v527 = vand.u32 %v526, 127
    %vm528 = vcmp.eq.s32.totalorder %v525, %v527
    %v529 = vsel %vm528, %v516, 0.0
    %v530 = vsel %vm41, %v529, 0.0
    %v531 = vrot.slane %v530, 4
    %v532 = vadd.f32 %v530, %v531
    %v533 = vrot.slane %v532, 2
    %v534 = vadd.f32 %v532, %v533
    %v535 = vrot.slane %v534, 1
    %v536 = vadd.f32 %v534, %v535
    %v537 = vadd.f32 %v523, %v536
    %v538 = vmul.f32 %v516, 2.0
    %v539 = vsub.f32 %v537, %v538
    %v540 = vmax.f32 %v539, 0.0
    %v541 = vrsqrt.pop %v540
    %v542 = vmul.f32 %v540, %v541
    %vm543 = vcmp.eq.f32.partialorder %v540, inf
    %v544 = vsel %vm543, %v540, %v542
    %vm545 = vcmp.eq.f32.partialorder %v540, 0.0
    %v546 = vand.u32 %v540, 2147483648
    %v547 = vsel %vm545, %v546, %v544
    %vm548 = vcmp.gt.s32.totalorder %v527, %v525
    %v549 = vsel %vm548, 1, 0
    %v550 = vcvt.s32.f32 %v549
    %v551 = vmul.f32 %v547, %v550
    %v552 = vmul.f32 %v551, %v46
    %v553 = vsel %vm41, %v552, 0.0
    %554 = vadd.xlane.f32.xlu0 %v553
    %v555 = vpop.xlane.xlu0 %554
    %v556 = vrot.slane %v555, 4
    %v557 = vadd.f32 %v555, %v556
    %v558 = vrot.slane %v557, 2
    %v559 = vadd.f32 %v557, %v558
    %v560 = vrot.slane %v559, 1
    %v561 = vadd.f32 %v559, %v560
    %s562 = vtos %v561
    %s563 = smul.f32 %s562, 10.0
    %v564 = vstv %s563
    %v565 = vrcp.pop %v564
    %s566 = vtos %v565
    %s567 = scalar_lea.smem [#allocation5], 0
    %568 = sst [smem:[%s567]] %s566
    // Predicated region
    $region18: #{tpu_custom_call.1} parent=1 // pred_check
      _
    $region19: #{tpu_custom_call.1} parent=1 // pred_check_branch
      %570 = sbr.rel (0) target = $region21
    $region20: #{tpu_custom_call.1} parent=1 // pred_region
      %s572 = ssub.s32 16, 16
      %573 = vsyncadd [#allocation4], %s572
      %576 = dma.smem_to_hbm [#allocation5], 16, %s3, [#allocation4]
    $region21: #{tpu_custom_call.1} parent=1 // pred_fallthru
      _
    // Predicated region
    $region22: #{tpu_custom_call.1} parent=1 // pred_check
      _
    $region23: #{tpu_custom_call.1} parent=1 // pred_check_branch
      %578 = sbr.rel (0) target = $region25
    $region24: #{tpu_custom_call.1} parent=1 // pred_region
      %579 = dma.done [#allocation4], 16
    $region25: #{tpu_custom_call.1} parent=1 // pred_fallthru
      _
    %580 = sfence
    %581 = vsyncpa [#allocation3], 1
    %582 = vsyncpa [#allocation4], 1

</llo_original>
